<compile_context>
chip_gen: v7x
topology: tpu7x:2x2x1
jax: 0.10.0
libtpu: 0.0.40
codegen_flags: <defaults>
</compile_context>

<pallas_src>
import functools

import jax
import jax.numpy as jnp
from jax import lax
from jax.experimental import pallas as pl
from jax.experimental.pallas import tpu as pltpu

IN_F = 2
HID = 64

_SQRT_2_OVER_PI = 0.7978845608028654
_INV_SQRT_2 = 0.7071067811865476


def _round_up(a, b):
    return pl.cdiv(a, b) * b


def _gelu_exact(x):
    # erf form: matches torch.nn.GELU() default; long VALU polynomial on TPU.
    return 0.5 * x * (1.0 + lax.erf(x * _INV_SQRT_2))


def _gelu_tanh(x):
    # tanh approximation (== torch.nn.GELU(approximate='tanh')): the transcendental
    # lands on the EUP slot, leaving the VALU nearly free.
    u = _SQRT_2_OVER_PI * (x + 0.044715 * (x * x * x))
    return 0.5 * x * (1.0 + jnp.tanh(u))


def _blockdiag(w, pack):
    """[k, n] -> [pack*k, pack*n] block-diagonal with `pack` copies of w."""
    k, n = w.shape
    out = jnp.zeros((pack * k, pack * n), w.dtype)
    for i in range(pack):
        out = out.at[i * k:(i + 1) * k, i * n:(i + 1) * n].set(w)
    return out


def _pack_and_min_steps():
    """Pick the lane-packing factor and minimum grid steps from the TPU generation."""
    try:
        kind = jax.devices()[0].device_kind.lower()
    except Exception:
        kind = ""
    if "v7" in kind:
        return 4, 2     # 256-wide MXU granule, 2 TensorCores/chip
    if "v6" in kind:
        return 4, 1     # 256-wide MXU granule, 1 TensorCore
    return 2, 1         # v5e and older: 128-wide MXU granule


def decoder_kernel(x_ref, w1_ref, b1_ref, w2_ref, b2_ref, w3_ref, b3_ref,
                   w4_ref, b4_ref, o_ref, *, exact, layer1_on_mxu):
    # x_ref:  [tile, pack*2]   (pack logical rows packed per sublane row)
    # w1_ref: [pack*2, pack*64] block-diag; w2..w4: [pack*64, pack*64] block-diag
    # b*_ref: [1, pack*64] (f32); o_ref: [tile, pack*64]
    gelu = _gelu_exact if exact else _gelu_tanh

    x = x_ref[...].astype(jnp.float32)
    b1 = b1_ref[...]

    if layer1_on_mxu:
        # Tiny-K dot: one extra MXU pass, zero VALU cost (MXU has slack on v6e/v7x).
        h = jnp.dot(x.astype(w1_ref.dtype), w1_ref[...],
                    preferred_element_type=jnp.float32) + b1
    else:
        # K is tiny -> rank-1 VPU updates, skip the MXU (which may bind on v5e).
        w1 = w1_ref[...].astype(jnp.float32)
        h = b1
        for k in range(x.shape[1]):
            h = h + x[:, k:k + 1] * w1[k:k + 1, :]
    h = gelu(h)

    md = w2_ref.dtype   # bf16 in fast mode, f32 in exact mode; accumulation always f32
    h = jnp.dot(h.astype(md), w2_ref[...], preferred_element_type=jnp.float32) + b2_ref[...]
    h = gelu(h)
    h = jnp.dot(h.astype(md), w3_ref[...], preferred_element_type=jnp.float32) + b3_ref[...]
    h = gelu(h)
    h = jnp.dot(h.astype(md), w4_ref[...], preferred_element_type=jnp.float32) + b4_ref[...]

    o_ref[...] = h.astype(o_ref.dtype)   # unmasked, lane-dense store (128 or 256 lanes)


@functools.partial(jax.jit, static_argnames=("tile_m", "exact", "pack", "min_steps"))
def _decoder_forward_impl(x, params, *, tile_m, exact, pack, min_steps):
    N, F = x.shape
    assert F == IN_F
    pin = pack * IN_F
    phid = pack * HID

    mm_dtype = jnp.float32 if exact else jnp.bfloat16
    layer1_on_mxu = (pack >= 4) and (not exact)

    # ---- pack parameters: `pack` independent copies, block-diagonal on the lane axis ----
    w1p = _blockdiag(params["w1"], pack).astype(mm_dtype if layer1_on_mxu else jnp.float32)
    w2p = _blockdiag(params["w2"], pack).astype(mm_dtype)
    w3p = _blockdiag(params["w3"], pack).astype(mm_dtype)
    w4p = _blockdiag(params["w4"], pack).astype(mm_dtype)
    b1p = jnp.tile(params["b1"], (1, pack))     # biases stay f32 (tiny, exact adds)
    b2p = jnp.tile(params["b2"], (1, pack))
    b3p = jnp.tile(params["b3"], (1, pack))
    b4p = jnp.tile(params["b4"], (1, pack))

    # ---- tiling: near-equal sublane-aligned tiles, bounded padding, >=min_steps steps ----
    M = pl.cdiv(N, pack)                         # packed rows needed
    g = max(pl.cdiv(M, max(int(tile_m), 8)), 1)
    if min_steps > 1 and M >= 8 * min_steps:     # give every TensorCore a grid step (v7x)
        g = max(g, min_steps)
    tile = _round_up(pl.cdiv(M, g), 8)           # always a multiple of 8 (sublane rule)
    M_pad = tile * g

    # ---- pad + pack input: [N, 2] -> [M_pad, pack*2] (contiguous reshape in HBM) ----
    n_pad_rows = M_pad * pack - N
    x_p = jnp.pad(x, ((0, n_pad_rows), (0, 0))) if n_pad_rows else x
    x_packed = x_p.reshape(M_pad, pin)

    full = lambda shape: pl.BlockSpec(shape, lambda i: (0, 0))
    kernel = functools.partial(decoder_kernel, exact=exact, layer1_on_mxu=layer1_on_mxu)

    out_packed = pl.pallas_call(
        kernel,
        out_shape=jax.ShapeDtypeStruct((M_pad, phid), x.dtype),
        grid_spec=pltpu.PrefetchScalarGridSpec(
            num_scalar_prefetch=0,
            grid=(g,),
            in_specs=[
                pl.BlockSpec((tile, pin), lambda i: (i, 0)),   # packed x tile
                full((pin, phid)), full((1, phid)),            # layer 1 (block-diag)
                full((phid, phid)), full((1, phid)),           # layer 2
                full((phid, phid)), full((1, phid)),           # layer 3
                full((phid, phid)), full((1, phid)),           # layer 4
            ],
            out_specs=pl.BlockSpec((tile, phid), lambda i: (i, 0)),
        ),
        compiler_params=pltpu.CompilerParams(
            dimension_semantics=("parallel",),     # megacore-shardable on v7x
            vmem_limit_bytes=32 * 1024 * 1024,
        ),
    )(x_packed, w1p, b1p, w2p, b2p, w3p, b3p, w4p, b4p)

    # Unpack: [M_pad, pack*64] -> [pack*M_pad, 64] is the inverse contiguous reshape.
    return out_packed.reshape(M_pad * pack, HID)[:N]


def decoder_forward(x, params, *, tile_m=2048, exact=False):
    """x: [N, 2] f32. params: dict of w1..w4 ([in,out]) and b1..b4 ([1,out]). Returns [N, 64].

    exact=False (default): tanh GELU (EUP) + bf16 MXU operands with f32 accumulation.
    exact=True:            erf GELU + f32 matmuls; matches PyTorch nn.GELU() to ~1e-5.
    tile_m is in *packed* rows (pack logical rows each).
    """
    pack, min_steps = _pack_and_min_steps()
    return _decoder_forward_impl(x, params, tile_m=int(tile_m), exact=bool(exact),
                                 pack=pack, min_steps=min_steps)


def init_params(key):
    """Deterministic init mimicking nn.Linear's uniform(-1/sqrt(fan_in), 1/sqrt(fan_in))."""
    dims = [(IN_F, HID), (HID, HID), (HID, HID), (HID, HID)]
    params = {}
    keys = jax.random.split(key, 2 * len(dims))
    for idx, (fan_in, fan_out) in enumerate(dims):
        bound = 1.0 / jnp.sqrt(float(fan_in))
        w = jax.random.uniform(keys[2 * idx], (fan_in, fan_out),
                               minval=-bound, maxval=bound, dtype=jnp.float32)
        b = jax.random.uniform(keys[2 * idx + 1], (1, fan_out),
                               minval=-bound, maxval=bound, dtype=jnp.float32)
        params[f"w{idx + 1}"] = w
        params[f"b{idx + 1}"] = b
    return params


def decoder_ref(x, params):
    """Pure-JAX reference with PyTorch nn.GELU() (exact erf) semantics."""
    h = x
    for i in range(1, 5):
        h = h @ params[f"w{i}"] + params[f"b{i}"]
        if i < 4:
            h = jax.nn.gelu(h, approximate=False)
    return h


if __name__ == "__main__":
    key = jax.random.PRNGKey(0)
    pkey, xkey = jax.random.split(key)
    params = init_params(pkey)

    # Small demo shape (batch=8, features=2), consistent with the module.
    x_small = jax.random.normal(xkey, (8, IN_F), dtype=jnp.float32)
    ref_small = decoder_ref(x_small, params)

    # Exact path: erf GELU + f32 matmuls -> tight parity with the PyTorch module.
    out_exact = jax.block_until_ready(decoder_forward(x_small, params, exact=True))
    assert out_exact.shape == (8, HID)
    assert jnp.allclose(out_exact, ref_small, atol=1e-5, rtol=1e-5), "mismatch (exact)"

    # Fast path (default): tanh GELU + bf16 MXU operands; relaxed tolerance vs exact ref.
    out_fast = jax.block_until_ready(decoder_forward(x_small, params))
    assert out_fast.shape == (8, HID)
    assert jnp.allclose(out_fast, ref_small, atol=5e-2, rtol=5e-2), "mismatch (fast)"

    # Odd, non-divisible batch with a small tile to exercise multi-step grid + padding.
    x_odd = jax.random.normal(jax.random.PRNGKey(1), (813, IN_F), dtype=jnp.float32)
    ref_odd = decoder_ref(x_odd, params)

    out_odd_exact = jax.block_until_ready(
        decoder_forward(x_odd, params, tile_m=64, exact=True))
    assert out_odd_exact.shape == (813, HID)
    assert jnp.allclose(out_odd_exact, ref_odd, atol=1e-5, rtol=1e-5), "mismatch (odd exact)"

    out_odd_fast = jax.block_until_ready(decoder_forward(x_odd, params, tile_m=64))
    assert out_odd_fast.shape == (813, HID)
    assert jnp.allclose(out_odd_fast, ref_odd, atol=5e-2, rtol=5e-2), "mismatch (odd fast)"

    print("KERNEL_OK")
</pallas_src>

<mosaic_0001>
module attributes {stable_mosaic.version = 11 : i64} {
  func.func @decoder_kernel(%arg0: i32, %arg1: memref<8x4xf32, #tpu.memory_space<vmem>>, %arg2: memref<4x128xf32, #tpu.memory_space<vmem>>, %arg3: memref<1x128xf32, #tpu.memory_space<vmem>>, %arg4: memref<128x128xf32, #tpu.memory_space<vmem>>, %arg5: memref<1x128xf32, #tpu.memory_space<vmem>>, %arg6: memref<128x128xf32, #tpu.memory_space<vmem>>, %arg7: memref<1x128xf32, #tpu.memory_space<vmem>>, %arg8: memref<128x128xf32, #tpu.memory_space<vmem>>, %arg9: memref<1x128xf32, #tpu.memory_space<vmem>>, %arg10: memref<8x128xf32, #tpu.memory_space<vmem>>) attributes {dimension_semantics = [#tpu.dimension_semantics<parallel>], iteration_bounds = array<i64: 1>, scalar_prefetch = 0 : i64, scratch_operands = 0 : i64, tpu.core_type = #tpu.core_type<tc>, window_params = [{transform_indices = @transform_0, window_bounds = array<i64: 8, 4>}, {pipeline_mode = #tpu.pipeline_mode<synchronous>, transform_indices = @transform_1, window_bounds = array<i64: 4, 128>}, {pipeline_mode = #tpu.pipeline_mode<synchronous>, transform_indices = @transform_2, window_bounds = array<i64: 1, 128>}, {pipeline_mode = #tpu.pipeline_mode<synchronous>, transform_indices = @transform_3, window_bounds = array<i64: 128, 128>}, {pipeline_mode = #tpu.pipeline_mode<synchronous>, transform_indices = @transform_4, window_bounds = array<i64: 1, 128>}, {pipeline_mode = #tpu.pipeline_mode<synchronous>, transform_indices = @transform_5, window_bounds = array<i64: 128, 128>}, {pipeline_mode = #tpu.pipeline_mode<synchronous>, transform_indices = @transform_6, window_bounds = array<i64: 1, 128>}, {pipeline_mode = #tpu.pipeline_mode<synchronous>, transform_indices = @transform_7, window_bounds = array<i64: 128, 128>}, {pipeline_mode = #tpu.pipeline_mode<synchronous>, transform_indices = @transform_8, window_bounds = array<i64: 1, 128>}, {transform_indices = @transform_9, window_bounds = array<i64: 8, 128>}]} {
    %c0 = arith.constant 0 : index
    %c0_0 = arith.constant 0 : index
    %0 = vector.load %arg1[%c0, %c0_0] : memref<8x4xf32, #tpu.memory_space<vmem>>, vector<8x4xf32>
    %c0_1 = arith.constant 0 : index
    %c0_2 = arith.constant 0 : index
    %1 = vector.load %arg3[%c0_1, %c0_2] : memref<1x128xf32, #tpu.memory_space<vmem>>, vector<1x128xf32>
    %c0_3 = arith.constant 0 : index
    %c0_4 = arith.constant 0 : index
    %2 = vector.load %arg2[%c0_3, %c0_4] : memref<4x128xf32, #tpu.memory_space<vmem>>, vector<4x128xf32>
    %3 = vector.extract_strided_slice %0 {offsets = [0, 0], sizes = [8, 1], strides = [1, 1]} : vector<8x4xf32> to vector<8x1xf32>
    %4 = vector.extract_strided_slice %2 {offsets = [0, 0], sizes = [1, 128], strides = [1, 1]} : vector<4x128xf32> to vector<1x128xf32>
    %5 = vector.broadcast %3 : vector<8x1xf32> to vector<8x128xf32>
    %6 = vector.broadcast %4 : vector<1x128xf32> to vector<8x128xf32>
    %7 = arith.mulf %5, %6 : vector<8x128xf32>
    %8 = vector.broadcast %1 : vector<1x128xf32> to vector<8x128xf32>
    %9 = arith.addf %8, %7 : vector<8x128xf32>
    %10 = vector.extract_strided_slice %0 {offsets = [0, 1], sizes = [8, 1], strides = [1, 1]} : vector<8x4xf32> to vector<8x1xf32>
    %11 = vector.extract_strided_slice %2 {offsets = [1, 0], sizes = [1, 128], strides = [1, 1]} : vector<4x128xf32> to vector<1x128xf32>
    %12 = vector.broadcast %10 : vector<8x1xf32> to vector<8x128xf32>
    %13 = vector.broadcast %11 : vector<1x128xf32> to vector<8x128xf32>
    %14 = arith.mulf %12, %13 : vector<8x128xf32>
    %15 = arith.addf %9, %14 : vector<8x128xf32>
    %16 = vector.extract_strided_slice %0 {offsets = [0, 2], sizes = [8, 1], strides = [1, 1]} : vector<8x4xf32> to vector<8x1xf32>
    %17 = vector.extract_strided_slice %2 {offsets = [2, 0], sizes = [1, 128], strides = [1, 1]} : vector<4x128xf32> to vector<1x128xf32>
    %18 = vector.broadcast %16 : vector<8x1xf32> to vector<8x128xf32>
    %19 = vector.broadcast %17 : vector<1x128xf32> to vector<8x128xf32>
    %20 = arith.mulf %18, %19 : vector<8x128xf32>
    %21 = arith.addf %15, %20 : vector<8x128xf32>
    %22 = vector.extract_strided_slice %0 {offsets = [0, 3], sizes = [8, 1], strides = [1, 1]} : vector<8x4xf32> to vector<8x1xf32>
    %23 = vector.extract_strided_slice %2 {offsets = [3, 0], sizes = [1, 128], strides = [1, 1]} : vector<4x128xf32> to vector<1x128xf32>
    %24 = vector.broadcast %22 : vector<8x1xf32> to vector<8x128xf32>
    %25 = vector.broadcast %23 : vector<1x128xf32> to vector<8x128xf32>
    %26 = arith.mulf %24, %25 : vector<8x128xf32>
    %27 = arith.addf %21, %26 : vector<8x128xf32>
    %cst = arith.constant 5.000000e-01 : f32
    %28 = vector.broadcast %cst : f32 to vector<8x128xf32>
    %29 = arith.mulf %28, %27 : vector<8x128xf32>
    %cst_5 = arith.constant 0.707106769 : f32
    %30 = vector.broadcast %cst_5 : f32 to vector<8x128xf32>
    %31 = arith.mulf %27, %30 : vector<8x128xf32>
    %32 = math.erf %31 : vector<8x128xf32>
    %cst_6 = arith.constant 1.000000e+00 : f32
    %33 = vector.broadcast %cst_6 : f32 to vector<8x128xf32>
    %34 = arith.addf %33, %32 : vector<8x128xf32>
    %35 = arith.mulf %29, %34 : vector<8x128xf32>
    %c0_7 = arith.constant 0 : index
    %c0_8 = arith.constant 0 : index
    %36 = vector.load %arg4[%c0_7, %c0_8] : memref<128x128xf32, #tpu.memory_space<vmem>>, vector<128x128xf32>
    %cst_9 = arith.constant dense<0.000000e+00> : vector<8x128xf32>
    %37 = tpu.matmul %35, %36, %cst_9 {dimension_numbers = #tpu.dot_dimension_numbers<[1], [0], [0], [1], [0, 0, 1, 1], [], []>} : vector<8x128xf32>, vector<128x128xf32>, vector<8x128xf32> -> vector<8x128xf32>
    %c0_10 = arith.constant 0 : index
    %c0_11 = arith.constant 0 : index
    %38 = vector.load %arg5[%c0_10, %c0_11] : memref<1x128xf32, #tpu.memory_space<vmem>>, vector<1x128xf32>
    %39 = vector.broadcast %38 : vector<1x128xf32> to vector<8x128xf32>
    %40 = arith.addf %37, %39 : vector<8x128xf32>
    %cst_12 = arith.constant 5.000000e-01 : f32
    %41 = vector.broadcast %cst_12 : f32 to vector<8x128xf32>
    %42 = arith.mulf %41, %40 : vector<8x128xf32>
    %cst_13 = arith.constant 0.707106769 : f32
    %43 = vector.broadcast %cst_13 : f32 to vector<8x128xf32>
    %44 = arith.mulf %40, %43 : vector<8x128xf32>
    %45 = math.erf %44 : vector<8x128xf32>
    %cst_14 = arith.constant 1.000000e+00 : f32
    %46 = vector.broadcast %cst_14 : f32 to vector<8x128xf32>
    %47 = arith.addf %46, %45 : vector<8x128xf32>
    %48 = arith.mulf %42, %47 : vector<8x128xf32>
    %c0_15 = arith.constant 0 : index
    %c0_16 = arith.constant 0 : index
    %49 = vector.load %arg6[%c0_15, %c0_16] : memref<128x128xf32, #tpu.memory_space<vmem>>, vector<128x128xf32>
    %cst_17 = arith.constant dense<0.000000e+00> : vector<8x128xf32>
    %50 = tpu.matmul %48, %49, %cst_17 {dimension_numbers = #tpu.dot_dimension_numbers<[1], [0], [0], [1], [0, 0, 1, 1], [], []>} : vector<8x128xf32>, vector<128x128xf32>, vector<8x128xf32> -> vector<8x128xf32>
    %c0_18 = arith.constant 0 : index
    %c0_19 = arith.constant 0 : index
    %51 = vector.load %arg7[%c0_18, %c0_19] : memref<1x128xf32, #tpu.memory_space<vmem>>, vector<1x128xf32>
    %52 = vector.broadcast %51 : vector<1x128xf32> to vector<8x128xf32>
    %53 = arith.addf %50, %52 : vector<8x128xf32>
    %cst_20 = arith.constant 5.000000e-01 : f32
    %54 = vector.broadcast %cst_20 : f32 to vector<8x128xf32>
    %55 = arith.mulf %54, %53 : vector<8x128xf32>
    %cst_21 = arith.constant 0.707106769 : f32
    %56 = vector.broadcast %cst_21 : f32 to vector<8x128xf32>
    %57 = arith.mulf %53, %56 : vector<8x128xf32>
    %58 = math.erf %57 : vector<8x128xf32>
    %cst_22 = arith.constant 1.000000e+00 : f32
    %59 = vector.broadcast %cst_22 : f32 to vector<8x128xf32>
    %60 = arith.addf %59, %58 : vector<8x128xf32>
    %61 = arith.mulf %55, %60 : vector<8x128xf32>
    %c0_23 = arith.constant 0 : index
    %c0_24 = arith.constant 0 : index
    %62 = vector.load %arg8[%c0_23, %c0_24] : memref<128x128xf32, #tpu.memory_space<vmem>>, vector<128x128xf32>
    %cst_25 = arith.constant dense<0.000000e+00> : vector<8x128xf32>
    %63 = tpu.matmul %61, %62, %cst_25 {dimension_numbers = #tpu.dot_dimension_numbers<[1], [0], [0], [1], [0, 0, 1, 1], [], []>} : vector<8x128xf32>, vector<128x128xf32>, vector<8x128xf32> -> vector<8x128xf32>
    %c0_26 = arith.constant 0 : index
    %c0_27 = arith.constant 0 : index
    %64 = vector.load %arg9[%c0_26, %c0_27] : memref<1x128xf32, #tpu.memory_space<vmem>>, vector<1x128xf32>
    %65 = vector.broadcast %64 : vector<1x128xf32> to vector<8x128xf32>
    %66 = arith.addf %63, %65 : vector<8x128xf32>
    %c0_28 = arith.constant 0 : index
    %c0_29 = arith.constant 0 : index
    %67 = vector.load %arg10[%c0_28, %c0_29] : memref<8x128xf32, #tpu.memory_space<vmem>>, vector<8x128xf32>
    tpu.vector_store %arg10[%c0_28, %c0_29], %66 {strides = array<i32>} : memref<8x128xf32, #tpu.memory_space<vmem>>, vector<8x128xf32>,
    return
  }
  func.func @transform_0(%arg0: i32) -> (i32, i32) {
    %c0_i32 = arith.constant 0 : i32
    %c0_i32_0 = arith.constant 0 : i32
    return %arg0, %c0_i32 : i32, i32
  }
  func.func @transform_1(%arg0: i32) -> (i32, i32) {
    %c0_i32 = arith.constant 0 : i32
    %c0_i32_0 = arith.constant 0 : i32
    %c0_i32_1 = arith.constant 0 : i32
    return %c0_i32, %c0_i32_0 : i32, i32
  }
  func.func @transform_2(%arg0: i32) -> (i32, i32) {
    %c0_i32 = arith.constant 0 : i32
    %c0_i32_0 = arith.constant 0 : i32
    %c0_i32_1 = arith.constant 0 : i32
    return %c0_i32, %c0_i32_0 : i32, i32
  }
  func.func @transform_3(%arg0: i32) -> (i32, i32) {
    %c0_i32 = arith.constant 0 : i32
    %c0_i32_0 = arith.constant 0 : i32
    %c0_i32_1 = arith.constant 0 : i32
    return %c0_i32, %c0_i32_0 : i32, i32
  }
  func.func @transform_4(%arg0: i32) -> (i32, i32) {
    %c0_i32 = arith.constant 0 : i32
    %c0_i32_0 = arith.constant 0 : i32
    %c0_i32_1 = arith.constant 0 : i32
    return %c0_i32, %c0_i32_0 : i32, i32
  }
  func.func @transform_5(%arg0: i32) -> (i32, i32) {
    %c0_i32 = arith.constant 0 : i32
    %c0_i32_0 = arith.constant 0 : i32
    %c0_i32_1 = arith.constant 0 : i32
    return %c0_i32, %c0_i32_0 : i32, i32
  }
  func.func @transform_6(%arg0: i32) -> (i32, i32) {
    %c0_i32 = arith.constant 0 : i32
    %c0_i32_0 = arith.constant 0 : i32
    %c0_i32_1 = arith.constant 0 : i32
    return %c0_i32, %c0_i32_0 : i32, i32
  }
  func.func @transform_7(%arg0: i32) -> (i32, i32) {
    %c0_i32 = arith.constant 0 : i32
    %c0_i32_0 = arith.constant 0 : i32
    %c0_i32_1 = arith.constant 0 : i32
    return %c0_i32, %c0_i32_0 : i32, i32
  }
  func.func @transform_8(%arg0: i32) -> (i32, i32) {
    %c0_i32 = arith.constant 0 : i32
    %c0_i32_0 = arith.constant 0 : i32
    %c0_i32_1 = arith.constant 0 : i32
    return %c0_i32, %c0_i32_0 : i32, i32
  }
  func.func @transform_9(%arg0: i32) -> (i32, i32) {
    %c0_i32 = arith.constant 0 : i32
    %c0_i32_0 = arith.constant 0 : i32
    return %arg0, %c0_i32 : i32, i32
  }
}

</mosaic_0001>

<llo_original>
// kernel: _decoder_forward_impl.1
$region0: #{_decoder_forward_impl.1}
  #allocation0 [shape = 'u32[]', space=smem, size = 0x4, offset = 0x4, fixed_abs, tag = 'smem constant byte address 0x4 - core index']
  #allocation1 [shape = 'u32[144,128]{1,0:T(1,128)}', space=vmem, size = 0x12000, scoped, tag = 'internal scratch']
  %s0 = inlined_call_operand.vmem [shape: f32[8,4], index: 0, kind: input, shape index: {}]
  %s1 = inlined_call_operand.vmem [shape: f32[4,128], index: 1, kind: input, shape index: {}]
  %s2 = inlined_call_operand.vmem [shape: f32[1,128], index: 2, kind: input, shape index: {}]
  %s3 = inlined_call_operand.vmem [shape: f32[128,128], index: 3, kind: input, shape index: {}]
  %s4 = inlined_call_operand.vmem [shape: f32[1,128], index: 4, kind: input, shape index: {}]
  %s5 = inlined_call_operand.vmem [shape: f32[128,128], index: 5, kind: input, shape index: {}]
  %s6 = inlined_call_operand.vmem [shape: f32[1,128], index: 6, kind: input, shape index: {}]
  %s7 = inlined_call_operand.vmem [shape: f32[128,128], index: 7, kind: input, shape index: {}]
  %s8 = inlined_call_operand.vmem [shape: f32[1,128], index: 8, kind: input, shape index: {}]
  %s9 = inlined_call_operand.vmem [shape: f32[8,128], index: 9, kind: output, shape index: {}]
  %s10 = sld [smem:[#allocation0]]
  $region46: #{_decoder_forward_impl.1} parent=0
    _
  %s12 = ssub.s32 1, %s10
  %s13 = scalar_select 0, %s12, %s10
  // Predicated region
  $region2: #{_decoder_forward_impl.1} parent=0 // pred_check
    _
  $region3: #{_decoder_forward_impl.1} parent=0 // pred_check_branch
    %15 = sbr.rel (0) target = $region5
  $region4: #{_decoder_forward_impl.1} parent=0 // pred_region
    _
  $region5: #{_decoder_forward_impl.1} parent=0 // pred_fallthru
    _
  // Predicated region
  $region6: #{_decoder_forward_impl.1} parent=0 // pred_check
    _
  $region7: #{_decoder_forward_impl.1} parent=0 // pred_check_branch
    %17 = sbr.rel (0) target = $region9
  $region8: #{_decoder_forward_impl.1} parent=0 // pred_region
    _
  $region9: #{_decoder_forward_impl.1} parent=0 // pred_fallthru
    _
  // Predicated region
  $region10: #{_decoder_forward_impl.1} parent=0 // pred_check
    _
  $region11: #{_decoder_forward_impl.1} parent=0 // pred_check_branch
    %19 = sbr.rel (0) target = $region13
  $region12: #{_decoder_forward_impl.1} parent=0 // pred_region
    _
  $region13: #{_decoder_forward_impl.1} parent=0 // pred_fallthru
    _
  // Predicated region
  $region14: #{_decoder_forward_impl.1} parent=0 // pred_check
    _
  $region15: #{_decoder_forward_impl.1} parent=0 // pred_check_branch
    %21 = sbr.rel (0) target = $region17
  $region16: #{_decoder_forward_impl.1} parent=0 // pred_region
    _
  $region17: #{_decoder_forward_impl.1} parent=0 // pred_fallthru
    _
  // Predicated region
  $region18: #{_decoder_forward_impl.1} parent=0 // pred_check
    _
  $region19: #{_decoder_forward_impl.1} parent=0 // pred_check_branch
    %23 = sbr.rel (0) target = $region21
  $region20: #{_decoder_forward_impl.1} parent=0 // pred_region
    _
  $region21: #{_decoder_forward_impl.1} parent=0 // pred_fallthru
    _
  // Predicated region
  $region22: #{_decoder_forward_impl.1} parent=0 // pred_check
    _
  $region23: #{_decoder_forward_impl.1} parent=0 // pred_check_branch
    %25 = sbr.rel (0) target = $region25
  $region24: #{_decoder_forward_impl.1} parent=0 // pred_region
    _
  $region25: #{_decoder_forward_impl.1} parent=0 // pred_fallthru
    _
  // Predicated region
  $region26: #{_decoder_forward_impl.1} parent=0 // pred_check
    _
  $region27: #{_decoder_forward_impl.1} parent=0 // pred_check_branch
    %27 = sbr.rel (0) target = $region29
  $region28: #{_decoder_forward_impl.1} parent=0 // pred_region
    _
  $region29: #{_decoder_forward_impl.1} parent=0 // pred_fallthru
    _
  // Predicated region
  $region30: #{_decoder_forward_impl.1} parent=0 // pred_check
    _
  $region31: #{_decoder_forward_impl.1} parent=0 // pred_check_branch
    %29 = sbr.rel (0) target = $region33
  $region32: #{_decoder_forward_impl.1} parent=0 // pred_region
    _
  $region33: #{_decoder_forward_impl.1} parent=0 // pred_fallthru
    _
  // Predicated region
  $region34: #{_decoder_forward_impl.1} parent=0 // pred_check
    _
  $region35: #{_decoder_forward_impl.1} parent=0 // pred_check_branch
    %31 = sbr.rel (0) target = $region37
  $region36: #{_decoder_forward_impl.1} parent=0 // pred_region
    _
  $region37: #{_decoder_forward_impl.1} parent=0 // pred_fallthru
    _
  %v32 = vld [vmem:[%s0] sm:$0xff]
  %v33 = vld [vmem:[%s2] sm:$0x1]
  %v34 = vld [vmem:[%s1] sm:$0xf]
  %36 = vset.pattern.permute.xlu0 0
  %37 = vperm.xlu0 %36, %v32
  %v38 = vpop.permute.xlu0 %37
  %v40 = vlaneseq
  %v41 = vshrl.u32 %v40, 7
  %v42 = vsub.s32 0, %v41
  %v43 = vrot.slane %v34, %v42
  %v44 = vmul.f32 %v38, %v43
  %v46 = vlaneseq
  %v47 = vshrl.u32 %v46, 7
  %v48 = vsub.s32 0, %v47
  %v49 = vrot.slane %v33, %v48
  %v51 = vadd.f32 %v49, %v44
  %52 = vset.pattern.permute.xlu0 1
  %53 = vperm.xlu0 %52, %v32
  %v54 = vpop.permute.xlu0 %53
  %v56 = vlaneseq
  %v57 = vshrl.u32 %v56, 7
  %v58 = vsub.s32 1, %v57
  %v59 = vrot.slane %v34, %v58
  %v60 = vmul.f32 %v54, %v59
  %v61 = vadd.f32 %v51, %v60
  %62 = vset.pattern.permute.xlu0 2
  %63 = vperm.xlu0 %62, %v32
  %v64 = vpop.permute.xlu0 %63
  %v66 = vlaneseq
  %v67 = vshrl.u32 %v66, 7
  %v68 = vsub.s32 2, %v67
  %v69 = vrot.slane %v34, %v68
  %v70 = vmul.f32 %v64, %v69
  %v71 = vadd.f32 %v61, %v70
  %72 = vset.pattern.permute.xlu0 3
  %73 = vperm.xlu0 %72, %v32
  %v74 = vpop.permute.xlu0 %73
  %v76 = vlaneseq
  %v77 = vshrl.u32 %v76, 7
  %v78 = vsub.s32 3, %v77
  %v79 = vrot.slane %v34, %v78
  %v80 = vmul.f32 %v74, %v79
  %v81 = vadd.f32 %v71, %v80
  %v82 = vmul.f32 %v81, 0.5
  %v83 = vmul.f32 %v81, 0.70710677
  %v84 = verf.f32.pop %v83
  %v85 = vadd.f32 %v84, 1.0
  %v86 = vmul.f32 %v82, %v85
  %v87 = vld [vmem:[%s3] sm:$0xff]
  %v88 = vld [vmem:[%s3 + $0x8] sm:$0xff]
  %v89 = vld [vmem:[%s3 + $0x10] sm:$0xff]
  %v90 = vld [vmem:[%s3 + $0x18] sm:$0xff]
  %v91 = vld [vmem:[%s3 + $0x20] sm:$0xff]
  %v92 = vld [vmem:[%s3 + $0x28] sm:$0xff]
  %v93 = vld [vmem:[%s3 + $0x30] sm:$0xff]
  %v94 = vld [vmem:[%s3 + $0x38] sm:$0xff]
  %v95 = vld [vmem:[%s3 + $0x40] sm:$0xff]
  %v96 = vld [vmem:[%s3 + $0x48] sm:$0xff]
  %v97 = vld [vmem:[%s3 + $0x50] sm:$0xff]
  %v98 = vld [vmem:[%s3 + $0x58] sm:$0xff]
  %v99 = vld [vmem:[%s3 + $0x60] sm:$0xff]
  %v100 = vld [vmem:[%s3 + $0x68] sm:$0xff]
  %v101 = vld [vmem:[%s3 + $0x70] sm:$0xff]
  %v102 = vld [vmem:[%s3 + $0x78] sm:$0xff]
  %v103 = vld [vmem:[%s4] sm:$0x1]
  %v105 = vlaneseq
  %v106 = vshrl.u32 %v105, 7
  %v107 = vsub.s32 0, %v106
  %v108 = vrot.slane %v103, %v107
  %110 = vmatprep.subr.mxu0 0.0
  %111 = vmatpush1.msra.mxu0 %v87
  %112 = vmatprep.subr.mxu0 0.0
  %113 = vmatpush1.msra.mxu0 %v88
  %114 = vmatprep.subr.mxu0 0.0
  %115 = vmatpush1.msra.mxu0 %v89
  %116 = vmatprep.subr.mxu0 0.0
  %117 = vmatpush1.msra.mxu0 %v90
  %118 = vmatprep.subr.mxu0 0.0
  %119 = vmatpush1.msra.mxu0 %v91
  %120 = vmatprep.subr.mxu0 0.0
  %121 = vmatpush1.msra.mxu0 %v92
  %122 = vmatprep.subr.mxu0 0.0
  %123 = vmatpush1.msra.mxu0 %v93
  %124 = vmatprep.subr.mxu0 0.0
  %125 = vmatpush1.msra.mxu0 %v94
  %126 = vmatprep.subr.mxu0 0.0
  %127 = vmatpush1.msra.mxu0 %v95
  %128 = vmatprep.subr.mxu0 0.0
  %129 = vmatpush1.msra.mxu0 %v96
  %130 = vmatprep.subr.mxu0 0.0
  %131 = vmatpush1.msra.mxu0 %v97
  %132 = vmatprep.subr.mxu0 0.0
  %133 = vmatpush1.msra.mxu0 %v98
  %134 = vmatprep.subr.mxu0 0.0
  %135 = vmatpush1.msra.mxu0 %v99
  %136 = vmatprep.subr.mxu0 0.0
  %137 = vmatpush1.msra.mxu0 %v100
  %138 = vmatprep.subr.mxu0 0.0
  %139 = vmatpush1.msra.mxu0 %v101
  %140 = vmatprep.subr.mxu0 0.0
  %141 = vmatpush1.msra.mxu0 %v102
  %142 = vmatprep.subr.mxu0 0.0
  %143 = vmatpush1.msra.mxu0 0.0
  %144 = vmatprep.subr.mxu0 0.0
  %145 = vmatpush1.msra.mxu0 0.0
  %146 = vmatprep.subr.mxu0 0.0
  %147 = vmatpush1.msra.mxu0 0.0
  %148 = vmatprep.subr.mxu0 0.0
  %149 = vmatpush1.msra.mxu0 0.0
  %150 = vmatprep.subr.mxu0 0.0
  %151 = vmatpush1.msra.mxu0 0.0
  %152 = vmatprep.subr.mxu0 0.0
  %153 = vmatpush1.msra.mxu0 0.0
  %154 = vmatprep.subr.mxu0 0.0
  %155 = vmatpush1.msra.mxu0 0.0
  %156 = vmatprep.subr.mxu0 0.0
  %157 = vmatpush1.msra.mxu0 0.0
  %158 = vmatprep.subr.mxu0 0.0
  %159 = vmatpush1.msra.mxu0 0.0
  %160 = vmatprep.subr.mxu0 0.0
  %161 = vmatpush1.msra.mxu0 0.0
  %162 = vmatprep.subr.mxu0 0.0
  %163 = vmatpush1.msra.mxu0 0.0
  %164 = vmatprep.subr.mxu0 0.0
  %165 = vmatpush1.msra.mxu0 0.0
  %166 = vmatprep.subr.mxu0 0.0
  %167 = vmatpush1.msra.mxu0 0.0
  %168 = vmatprep.subr.mxu0 0.0
  %169 = vmatpush1.msra.mxu0 0.0
  %170 = vmatprep.subr.mxu0 0.0
  %171 = vmatpush1.msra.mxu0 0.0
  %172 = vmatprep.subr.mxu0 0.0
  %173 = vmatpush1.msra.mxu0 0.0
  %174 = vmatprep.mubr.f32.mxu0 0.0
  %175 = vmatmul.mubr.f32.gmra.mrb[0].mxu0 %v86
  %v176 = vpop.f32.mrb[0].mxu0
  %v177 = vadd.f32 %v108, %v176
  %v178 = vpop.f32.mrb[0].mxu0
  %179 = vdwg.mxu0
  %v180 = vmul.f32 %v177, 0.5
  %v181 = vmul.f32 %v177, 0.70710677
  %v182 = verf.f32.pop %v181
  %v183 = vadd.f32 %v182, 1.0
  %v184 = vmul.f32 %v180, %v183
  %v185 = vld [vmem:[%s5] sm:$0xff]
  %v186 = vld [vmem:[%s5 + $0x8] sm:$0xff]
  %v187 = vld [vmem:[%s5 + $0x10] sm:$0xff]
  %v188 = vld [vmem:[%s5 + $0x18] sm:$0xff]
  %v189 = vld [vmem:[%s5 + $0x20] sm:$0xff]
  %v190 = vld [vmem:[%s5 + $0x28] sm:$0xff]
  %v191 = vld [vmem:[%s5 + $0x30] sm:$0xff]
  %v192 = vld [vmem:[%s5 + $0x38] sm:$0xff]
  %v193 = vld [vmem:[%s5 + $0x40] sm:$0xff]
  %v194 = vld [vmem:[%s5 + $0x48] sm:$0xff]
  %v195 = vld [vmem:[%s5 + $0x50] sm:$0xff]
  %v196 = vld [vmem:[%s5 + $0x58] sm:$0xff]
  %v197 = vld [vmem:[%s5 + $0x60] sm:$0xff]
  %v198 = vld [vmem:[%s5 + $0x68] sm:$0xff]
  %v199 = vld [vmem:[%s5 + $0x70] sm:$0xff]
  %v200 = vld [vmem:[%s5 + $0x78] sm:$0xff]
  %v201 = vld [vmem:[%s6] sm:$0x1]
  %v203 = vlaneseq
  %v204 = vshrl.u32 %v203, 7
  %v205 = vsub.s32 0, %v204
  %v206 = vrot.slane %v201, %v205
  %208 = vmatprep.subr.mxu0 0.0
  %209 = vmatpush1.msra.mxu0 %v185
  %210 = vmatprep.subr.mxu0 0.0
  %211 = vmatpush1.msra.mxu0 %v186
  %212 = vmatprep.subr.mxu0 0.0
  %213 = vmatpush1.msra.mxu0 %v187
  %214 = vmatprep.subr.mxu0 0.0
  %215 = vmatpush1.msra.mxu0 %v188
  %216 = vmatprep.subr.mxu0 0.0
  %217 = vmatpush1.msra.mxu0 %v189
  %218 = vmatprep.subr.mxu0 0.0
  %219 = vmatpush1.msra.mxu0 %v190
  %220 = vmatprep.subr.mxu0 0.0
  %221 = vmatpush1.msra.mxu0 %v191
  %222 = vmatprep.subr.mxu0 0.0
  %223 = vmatpush1.msra.mxu0 %v192
  %224 = vmatprep.subr.mxu0 0.0
  %225 = vmatpush1.msra.mxu0 %v193
  %226 = vmatprep.subr.mxu0 0.0
  %227 = vmatpush1.msra.mxu0 %v194
  %228 = vmatprep.subr.mxu0 0.0
  %229 = vmatpush1.msra.mxu0 %v195
  %230 = vmatprep.subr.mxu0 0.0
  %231 = vmatpush1.msra.mxu0 %v196
  %232 = vmatprep.subr.mxu0 0.0
  %233 = vmatpush1.msra.mxu0 %v197
  %234 = vmatprep.subr.mxu0 0.0
  %235 = vmatpush1.msra.mxu0 %v198
  %236 = vmatprep.subr.mxu0 0.0
  %237 = vmatpush1.msra.mxu0 %v199
  %238 = vmatprep.subr.mxu0 0.0
  %239 = vmatpush1.msra.mxu0 %v200
  %240 = vmatprep.subr.mxu0 0.0
  %241 = vmatpush1.msra.mxu0 0.0
  %242 = vmatprep.subr.mxu0 0.0
  %243 = vmatpush1.msra.mxu0 0.0
  %244 = vmatprep.subr.mxu0 0.0
  %245 = vmatpush1.msra.mxu0 0.0
  %246 = vmatprep.subr.mxu0 0.0
  %247 = vmatpush1.msra.mxu0 0.0
  %248 = vmatprep.subr.mxu0 0.0
  %249 = vmatpush1.msra.mxu0 0.0
  %250 = vmatprep.subr.mxu0 0.0
  %251 = vmatpush1.msra.mxu0 0.0
  %252 = vmatprep.subr.mxu0 0.0
  %253 = vmatpush1.msra.mxu0 0.0
  %254 = vmatprep.subr.mxu0 0.0
  %255 = vmatpush1.msra.mxu0 0.0
  %256 = vmatprep.subr.mxu0 0.0
  %257 = vmatpush1.msra.mxu0 0.0
  %258 = vmatprep.subr.mxu0 0.0
  %259 = vmatpush1.msra.mxu0 0.0
  %260 = vmatprep.subr.mxu0 0.0
  %261 = vmatpush1.msra.mxu0 0.0
  %262 = vmatprep.subr.mxu0 0.0
  %263 = vmatpush1.msra.mxu0 0.0
  %264 = vmatprep.subr.mxu0 0.0
  %265 = vmatpush1.msra.mxu0 0.0
  %266 = vmatprep.subr.mxu0 0.0
  %267 = vmatpush1.msra.mxu0 0.0
  %268 = vmatprep.subr.mxu0 0.0
  %269 = vmatpush1.msra.mxu0 0.0
  %270 = vmatprep.subr.mxu0 0.0
  %271 = vmatpush1.msra.mxu0 0.0
  %272 = vmatprep.mubr.f32.mxu0 0.0
  %273 = vmatmul.mubr.f32.gmra.mrb[0].mxu0 %v184
  %v274 = vpop.f32.mrb[0].mxu0
  %v275 = vadd.f32 %v206, %v274
  %v276 = vpop.f32.mrb[0].mxu0
  %277 = vdwg.mxu0
  %v278 = vmul.f32 %v275, 0.5
  %v279 = vmul.f32 %v275, 0.70710677
  %v280 = verf.f32.pop %v279
  %v281 = vadd.f32 %v280, 1.0
  %v282 = vmul.f32 %v278, %v281
  %v283 = vld [vmem:[%s7] sm:$0xff]
  %v284 = vld [vmem:[%s7 + $0x8] sm:$0xff]
  %v285 = vld [vmem:[%s7 + $0x10] sm:$0xff]
  %v286 = vld [vmem:[%s7 + $0x18] sm:$0xff]
  %v287 = vld [vmem:[%s7 + $0x20] sm:$0xff]
  %v288 = vld [vmem:[%s7 + $0x28] sm:$0xff]
  %v289 = vld [vmem:[%s7 + $0x30] sm:$0xff]
  %v290 = vld [vmem:[%s7 + $0x38] sm:$0xff]
  %v291 = vld [vmem:[%s7 + $0x40] sm:$0xff]
  %v292 = vld [vmem:[%s7 + $0x48] sm:$0xff]
  %v293 = vld [vmem:[%s7 + $0x50] sm:$0xff]
  %v294 = vld [vmem:[%s7 + $0x58] sm:$0xff]
  %v295 = vld [vmem:[%s7 + $0x60] sm:$0xff]
  %v296 = vld [vmem:[%s7 + $0x68] sm:$0xff]
  %v297 = vld [vmem:[%s7 + $0x70] sm:$0xff]
  %v298 = vld [vmem:[%s7 + $0x78] sm:$0xff]
  %v299 = vld [vmem:[%s8] sm:$0x1]
  %v301 = vlaneseq
  %v302 = vshrl.u32 %v301, 7
  %v303 = vsub.s32 0, %v302
  %v304 = vrot.slane %v299, %v303
  %306 = vmatprep.subr.mxu0 0.0
  %307 = vmatpush1.msra.mxu0 %v283
  %308 = vmatprep.subr.mxu0 0.0
  %309 = vmatpush1.msra.mxu0 %v284
  %310 = vmatprep.subr.mxu0 0.0
  %311 = vmatpush1.msra.mxu0 %v285
  %312 = vmatprep.subr.mxu0 0.0
  %313 = vmatpush1.msra.mxu0 %v286
  %314 = vmatprep.subr.mxu0 0.0
  %315 = vmatpush1.msra.mxu0 %v287
  %316 = vmatprep.subr.mxu0 0.0
  %317 = vmatpush1.msra.mxu0 %v288
  %318 = vmatprep.subr.mxu0 0.0
  %319 = vmatpush1.msra.mxu0 %v289
  %320 = vmatprep.subr.mxu0 0.0
  %321 = vmatpush1.msra.mxu0 %v290
  %322 = vmatprep.subr.mxu0 0.0
  %323 = vmatpush1.msra.mxu0 %v291
  %324 = vmatprep.subr.mxu0 0.0
  %325 = vmatpush1.msra.mxu0 %v292
  %326 = vmatprep.subr.mxu0 0.0
  %327 = vmatpush1.msra.mxu0 %v293
  %328 = vmatprep.subr.mxu0 0.0
  %329 = vmatpush1.msra.mxu0 %v294
  %330 = vmatprep.subr.mxu0 0.0
  %331 = vmatpush1.msra.mxu0 %v295
  %332 = vmatprep.subr.mxu0 0.0
  %333 = vmatpush1.msra.mxu0 %v296
  %334 = vmatprep.subr.mxu0 0.0
  %335 = vmatpush1.msra.mxu0 %v297
  %336 = vmatprep.subr.mxu0 0.0
  %337 = vmatpush1.msra.mxu0 %v298
  %338 = vmatprep.subr.mxu0 0.0
  %339 = vmatpush1.msra.mxu0 0.0
  %340 = vmatprep.subr.mxu0 0.0
  %341 = vmatpush1.msra.mxu0 0.0
  %342 = vmatprep.subr.mxu0 0.0
  %343 = vmatpush1.msra.mxu0 0.0
  %344 = vmatprep.subr.mxu0 0.0
  %345 = vmatpush1.msra.mxu0 0.0
  %346 = vmatprep.subr.mxu0 0.0
  %347 = vmatpush1.msra.mxu0 0.0
  %348 = vmatprep.subr.mxu0 0.0
  %349 = vmatpush1.msra.mxu0 0.0
  %350 = vmatprep.subr.mxu0 0.0
  %351 = vmatpush1.msra.mxu0 0.0
  %352 = vmatprep.subr.mxu0 0.0
  %353 = vmatpush1.msra.mxu0 0.0
  %354 = vmatprep.subr.mxu0 0.0
  %355 = vmatpush1.msra.mxu0 0.0
  %356 = vmatprep.subr.mxu0 0.0
  %357 = vmatpush1.msra.mxu0 0.0
  %358 = vmatprep.subr.mxu0 0.0
  %359 = vmatpush1.msra.mxu0 0.0
  %360 = vmatprep.subr.mxu0 0.0
  %361 = vmatpush1.msra.mxu0 0.0
  %362 = vmatprep.subr.mxu0 0.0
  %363 = vmatpush1.msra.mxu0 0.0
  %364 = vmatprep.subr.mxu0 0.0
  %365 = vmatpush1.msra.mxu0 0.0
  %366 = vmatprep.subr.mxu0 0.0
  %367 = vmatpush1.msra.mxu0 0.0
  %368 = vmatprep.subr.mxu0 0.0
  %369 = vmatpush1.msra.mxu0 0.0
  %370 = vmatprep.mubr.f32.mxu0 0.0
  %371 = vmatmul.mubr.f32.gmra.mrb[0].mxu0 %v282
  %v372 = vpop.f32.mrb[0].mxu0
  %v373 = vadd.f32 %v304, %v372
  %v374 = vpop.f32.mrb[0].mxu0
  %375 = vdwg.mxu0
  %376 = vst [vmem:[%s9] sm:$0xff] %v373
  // Predicated region
  $region38: #{_decoder_forward_impl.1} parent=0 // pred_check
    _
  $region39: #{_decoder_forward_impl.1} parent=0 // pred_check_branch
    %378 = sbr.rel (0) target = $region41
  $region40: #{_decoder_forward_impl.1} parent=0 // pred_region
    _
  $region41: #{_decoder_forward_impl.1} parent=0 // pred_fallthru
    _
  // Predicated region
  $region42: #{_decoder_forward_impl.1} parent=0 // pred_check
    _
  $region43: #{_decoder_forward_impl.1} parent=0 // pred_check_branch
    %380 = sbr.rel (0) target = $region45
  $region44: #{_decoder_forward_impl.1} parent=0 // pred_region
    _
  $region45: #{_decoder_forward_impl.1} parent=0 // pred_fallthru
    _

</llo_original>
